<compile_context>
chip_gen: v7x
topology: tpu7x:2x2x1
jax: 0.10.0
libtpu: 0.0.40
codegen_flags: <defaults>
</compile_context>

<pallas_src>
import functools

import jax
import jax.numpy as jnp
from jax import lax
from jax.experimental import pallas as pl
from jax.experimental.pallas import tpu as pltpu


def _sublane_multiple(dtype) -> int:
    # Second-to-last-dim tiling: 8 for 4-byte, 16 for 2-byte, 32 for 1-byte.
    itemsize = jnp.dtype(dtype).itemsize
    return max(8, 32 // itemsize)


def _device_defaults():
    """Per-generation block-byte target / scoped-VMEM limit / min grid steps."""
    kind = ""
    try:
        kind = jax.devices()[0].device_kind.lower()
    except Exception:  # pragma: no cover
        pass
    if "v7" in kind:
        # 3.2 TB/s HBM: big blocks to hide the ~0.35us/step overhead; 2 TCs
        # need >= 2 grid steps; 64 MiB physical VMEM -> 48 MiB scoped.
        return {"target_block_bytes": 8 << 20, "vmem_limit_bytes": 48 << 20,
                "min_grid_steps": 2}
    if "v6" in kind:
        return {"target_block_bytes": 6 << 20, "vmem_limit_bytes": 48 << 20,
                "min_grid_steps": 1}
    if "v5 lite" in kind or "v5e" in kind or "v5lite" in kind:
        # Binding constraint is the 16 MiB default scoped-VMEM limit.
        return {"target_block_bytes": 4 << 20, "vmem_limit_bytes": 28 << 20,
                "min_grid_steps": 1}
    return {"target_block_bytes": 2 << 20, "vmem_limit_bytes": None,
            "min_grid_steps": 1}


def _class_block(n_cls, request, per_class_bytes, sub, defaults):
    """Pick the classes-per-grid-step block size."""
    if request is None:
        request = max(1, defaults["target_block_bytes"] // max(1, per_class_bytes))
    b = max(1, min(int(request), n_cls))
    steps = defaults["min_grid_steps"]
    if steps > 1:
        b = min(b, -(-n_cls // steps))  # keep >= `steps` grid steps (megacore)
    if b < n_cls:
        # 2-D class-major blocks (squeezed prefix) need a sublane-multiple size.
        b = min(n_cls, ((b + sub - 1) // sub) * sub)
    return b


# ---------------------------------------------------------------------------
# 1) Faithful-signature kernels: concat([prefix, ctx, suffix]) per class block.
# ---------------------------------------------------------------------------
def _concat_dma_kernel(prefix_ref, ctx_ref, suffix_hbm, out_ref, sem, *,
                       n_ctx, n_cls, block_classes):
    """4-byte dtypes: suffix rows stream HBM -> out VMEM block by direct DMA."""
    i = pl.program_id(0)
    b, seq_len, _ = out_ref.shape
    n_suffix = seq_len - 1 - n_ctx
    base = i * block_classes
    rem = n_cls % block_classes
    last = pl.num_programs(0) - 1

    def suffix_copy(rows):
        return pltpu.make_async_copy(
            suffix_hbm.at[pl.ds(base, rows), :, :],
            out_ref.at[:rows, 1 + n_ctx:1 + n_ctx + n_suffix, :],
            sem.at[0])

    # Start the bulk-suffix DMA (partial last class block copies only the
    # valid rows so the HBM read stays in bounds).
    if rem == 0:
        suffix_copy(block_classes).start()
    else:
        @pl.when(i != last)
        def _():
            suffix_copy(block_classes).start()

        @pl.when(i == last)
        def _():
            suffix_copy(rem).start()

    # Prefix row + ctx rows via bounded per-class vector stores while the
    # DMA is in flight (vreg footprint independent of the class-block size).
    ctx_vals = ctx_ref[...]

    def body(c, carry):
        out_ref[c, 0:1, :] = prefix_ref[pl.ds(c, 1), :]
        out_ref[c, 1:1 + n_ctx, :] = ctx_vals
        return carry

    lax.fori_loop(0, b, body, 0)

    if rem == 0:
        suffix_copy(block_classes).wait()
    else:
        @pl.when(i != last)
        def _():
            suffix_copy(block_classes).wait()

        @pl.when(i == last)
        def _():
            suffix_copy(rem).wait()


def _concat_vec_kernel(prefix_ref, ctx_ref, suffix_ref, out_ref, *, n_ctx):
    """Packed dtypes (bf16/fp16/int8): the suffix destination offset is not a
    multiple of the packing, so keep the proven vector copy path."""
    b = out_ref.shape[0]
    n_suffix = suffix_ref.shape[1]
    ctx_vals = ctx_ref[...]

    def body(c, carry):
        out_ref[c, 0:1, :] = prefix_ref[pl.ds(c, 1), :]
        out_ref[c, 1:1 + n_ctx, :] = ctx_vals
        out_ref[c, 1 + n_ctx:1 + n_ctx + n_suffix, :] = suffix_ref[c, :, :]
        return carry

    lax.fori_loop(0, b, body, 0)


def prompt_learner_forward(ctx, token_prefix, token_suffix, *,
                           block_classes=None, vmem_limit_bytes=None):
    """prompts = concat([token_prefix, broadcast(ctx), token_suffix], axis=-2)."""
    n_ctx, d = ctx.shape
    n_cls, one, d_p = token_prefix.shape
    n_suffix = token_suffix.shape[1]
    assert one == 1 and d_p == d and token_suffix.shape == (n_cls, n_suffix, d)
    assert token_prefix.dtype == ctx.dtype and token_suffix.dtype == ctx.dtype
    seq_len = 1 + n_ctx + n_suffix

    dtype = ctx.dtype
    itemsize = jnp.dtype(dtype).itemsize
    sub = _sublane_multiple(dtype)
    defaults = _device_defaults()
    if vmem_limit_bytes is None:
        vmem_limit_bytes = defaults["vmem_limit_bytes"]

    b = _class_block(n_cls, block_classes, seq_len * d * itemsize, sub, defaults)
    grid = (pl.cdiv(n_cls, b),)

    # Squeeze the prefix: (n_cls, 1, D) pads each class's single row to a full
    # sublane tile in HBM; (n_cls, D) is dense.
    prefix2d = token_prefix.reshape(n_cls, d)

    bytes_accessed = (ctx.size + prefix2d.size + token_suffix.size
                      + n_cls * seq_len * d) * itemsize
    cost = pl.CostEstimate(flops=0, transcendentals=0,
                           bytes_accessed=int(bytes_accessed))

    common_in_specs = [
        pl.BlockSpec((b, d), lambda i: (i, 0)),        # prefix (class block)
        pl.BlockSpec((n_ctx, d), lambda i: (0, 0)),    # ctx (VMEM resident)
    ]
    if itemsize == 4:
        kernel = functools.partial(_concat_dma_kernel, n_ctx=n_ctx,
                                   n_cls=n_cls, block_classes=b)
        in_specs = common_in_specs + [pl.BlockSpec(memory_space=pl.ANY)]
        scratch = [pltpu.SemaphoreType.DMA((1,))]
    else:
        kernel = functools.partial(_concat_vec_kernel, n_ctx=n_ctx)
        in_specs = common_in_specs + [
            pl.BlockSpec((b, n_suffix, d), lambda i: (i, 0, 0))]
        scratch = []

    return pl.pallas_call(
        kernel,
        out_shape=jax.ShapeDtypeStruct((n_cls, seq_len, d), dtype),
        grid_spec=pltpu.PrefetchScalarGridSpec(
            num_scalar_prefetch=0,
            grid=grid,
            in_specs=in_specs,
            out_specs=pl.BlockSpec((b, seq_len, d), lambda i: (i, 0, 0)),
            scratch_shapes=scratch,
        ),
        compiler_params=pltpu.CompilerParams(
            dimension_semantics=("parallel",),
            vmem_limit_bytes=vmem_limit_bytes),
        cost_estimate=cost,
    )(prefix2d, ctx, token_suffix)


# ---------------------------------------------------------------------------
# 2) Production fast path: the full CLIP token embedding (n_cls, L, D) already
#    holds prefix and suffix in place.  Alias it as the output; only the
#    sublane-aligned leading slab containing the ctx rows is ever written back,
#    and only its non-ctx rows are read.
# ---------------------------------------------------------------------------
def _inplace_dma_kernel(ctx_ref, emb_hbm, out_ref, sem, *,
                        n_ctx, n_cls, block_classes):
    """4-byte dtypes: DMA only row 0 and the leading suffix rows of the slab
    straight into the output block; ctx rows are the only vector stores."""
    i = pl.program_id(0)
    b, t, _ = out_ref.shape
    base = i * block_classes
    tail0 = 1 + n_ctx
    rem = n_cls % block_classes
    last = pl.num_programs(0) - 1

    def copies(rows):
        cps = [pltpu.make_async_copy(
            emb_hbm.at[pl.ds(base, rows), 0:1, :],
            out_ref.at[:rows, 0:1, :], sem.at[0])]
        if tail0 < t:
            cps.append(pltpu.make_async_copy(
                emb_hbm.at[pl.ds(base, rows), tail0:t, :],
                out_ref.at[:rows, tail0:t, :], sem.at[1]))
        return cps

    def start(rows):
        for cp in copies(rows):
            cp.start()

    def wait(rows):
        for cp in copies(rows):
            cp.wait()

    if rem == 0:
        start(block_classes)
    else:
        @pl.when(i != last)
        def _():
            start(block_classes)

        @pl.when(i == last)
        def _():
            start(rem)

    ctx_vals = ctx_ref[...]

    def body(c, carry):
        out_ref[c, 1:1 + n_ctx, :] = ctx_vals
        return carry

    lax.fori_loop(0, b, body, 0)

    if rem == 0:
        wait(block_classes)
    else:
        @pl.when(i != last)
        def _():
            wait(block_classes)

        @pl.when(i == last)
        def _():
            wait(rem)


def _inplace_vec_kernel(ctx_ref, emb_ref, out_ref, *, n_ctx):
    """Packed dtypes: blocked slab input; copy only the non-ctx rows."""
    b, t, _ = out_ref.shape
    tail0 = 1 + n_ctx
    ctx_vals = ctx_ref[...]

    def body(c, carry):
        out_ref[c, 0:1, :] = emb_ref[c, 0:1, :]
        out_ref[c, 1:tail0, :] = ctx_vals
        if tail0 < t:                                  # static at trace time
            out_ref[c, tail0:t, :] = emb_ref[c, tail0:t, :]
        return carry

    lax.fori_loop(0, b, body, 0)


def prompt_learner_forward_inplace(ctx, token_embedding, *,
                                   block_classes=None, vmem_limit_bytes=None):
    """Same semantics as prompt_learner_forward, with the output aliasing
    `token_embedding` (= clip token embedding of the tokenized prompts, rows
    [prefix | placeholder ctx | suffix]).  Only the leading
    round_up(1 + n_ctx, sublane) token rows are written back; the remaining
    suffix rows never move and are preserved through the aliasing.

    Production note: donate `token_embedding` at the jit boundary
    (jax.jit(..., donate_argnums=...)); otherwise XLA inserts a defensive copy
    of the full (n_cls, L, D) buffer and the ~4x HBM-traffic saving is lost.
    Prefer bf16 storage end-to-end: this op is pure HBM streaming.
    """
    n_ctx, d = ctx.shape
    n_cls, seq_len, d_e = token_embedding.shape
    assert d_e == d and token_embedding.dtype == ctx.dtype
    assert seq_len >= 1 + n_ctx

    dtype = ctx.dtype
    itemsize = jnp.dtype(dtype).itemsize
    sub = _sublane_multiple(dtype)
    t = min(seq_len, ((1 + n_ctx + sub - 1) // sub) * sub)  # aligned slab height
    tail = max(0, t - 1 - n_ctx)

    defaults = _device_defaults()
    if vmem_limit_bytes is None:
        vmem_limit_bytes = defaults["vmem_limit_bytes"]

    b = _class_block(n_cls, block_classes, 2 * t * d * itemsize, sub, defaults)
    grid = (pl.cdiv(n_cls, b),)

    use_dma = itemsize == 4  # unaligned row offsets are word-granular only for 4B
    read_rows = (1 + tail) if use_dma else t
    bytes_accessed = (ctx.size + n_cls * read_rows * d + n_cls * t * d) * itemsize
    cost = pl.CostEstimate(flops=0, transcendentals=0,
                           bytes_accessed=int(bytes_accessed))

    if use_dma:
        kernel = functools.partial(_inplace_dma_kernel, n_ctx=n_ctx,
                                   n_cls=n_cls, block_classes=b)
        emb_spec = pl.BlockSpec(memory_space=pl.ANY)
        scratch = [pltpu.SemaphoreType.DMA((2,))]
    else:
        kernel = functools.partial(_inplace_vec_kernel, n_ctx=n_ctx)
        emb_spec = pl.BlockSpec((b, t, d), lambda i: (i, 0, 0))
        scratch = []

    return pl.pallas_call(
        kernel,
        out_shape=jax.ShapeDtypeStruct((n_cls, seq_len, d), dtype),
        grid_spec=pltpu.PrefetchScalarGridSpec(
            num_scalar_prefetch=0,
            grid=grid,
            in_specs=[
                pl.BlockSpec((n_ctx, d), lambda i: (0, 0)),  # ctx (resident)
                emb_spec,
            ],
            # Only token-block 0 (the slab) of the aliased output is written;
            # the remaining suffix rows keep their original values.
            out_specs=pl.BlockSpec((b, t, d), lambda i: (i, 0, 0)),
            scratch_shapes=scratch,
        ),
        input_output_aliases={1: 0},  # output aliases token_embedding
        compiler_params=pltpu.CompilerParams(
            dimension_semantics=("parallel",),
            vmem_limit_bytes=vmem_limit_bytes),
        cost_estimate=cost,
    )(ctx, token_embedding)


# ---------------------------------------------------------------------------
# Pure-JAX reference (mirrors torch.cat([prefix, ctx, suffix], dim=-2)).
# ---------------------------------------------------------------------------
def reference_forward(ctx, token_prefix, token_suffix):
    n_cls = token_prefix.shape[0]
    ctx_b = jnp.broadcast_to(ctx[None, :, :], (n_cls,) + ctx.shape)
    return jnp.concatenate([token_prefix, ctx_b, token_suffix], axis=-2)


if __name__ == "__main__":
    # Small but layout-realistic shapes: CLIP sequence length 77, n_ctx=16,
    # lane-dense embedding dim (multiple of 128).
    n_cls, n_ctx, ctx_dim, seq_len = 32, 16, 128, 77

    key = jax.random.PRNGKey(0)
    k_ctx, k_emb = jax.random.split(key)

    # ctx_vectors = nn.init.normal_(torch.empty(n_ctx, ctx_dim), std=0.02)
    ctx = (0.02 * jax.random.normal(k_ctx, (n_ctx, ctx_dim))).astype(jnp.float32)

    # Deterministic synthetic stand-in for clip_model.token_embedding(prompts).
    embedding = jax.random.normal(
        k_emb, (n_cls, seq_len, ctx_dim)).astype(jnp.float32)
    token_prefix = embedding[:, :1, :]
    token_suffix = embedding[:, 1 + n_ctx:, :]

    expected = reference_forward(ctx, token_prefix, token_suffix)

    # 1) concat kernel, default block size (suffix streamed by direct DMA).
    p1 = prompt_learner_forward(ctx, token_prefix, token_suffix)
    jax.block_until_ready(p1)
    assert p1.shape == (n_cls, seq_len, ctx_dim)
    assert jnp.array_equal(p1, expected), "concat kernel mismatch"

    # 1b) explicit multi-step grid, block divides n_cls.
    p1b = prompt_learner_forward(ctx, token_prefix, token_suffix, block_classes=8)
    jax.block_until_ready(p1b)
    assert jnp.array_equal(p1b, expected), "concat kernel (block=8) mismatch"

    # 1c) non-divisible class count (30 % 8 != 0) -> partial last class block.
    p1c = prompt_learner_forward(ctx, token_prefix[:30], token_suffix[:30],
                                 block_classes=8)
    jax.block_until_ready(p1c)
    assert jnp.array_equal(p1c, expected[:30]), "concat kernel (partial) mismatch"

    # 2) in-place aliased kernel (f32 -> DMA of only the non-ctx slab rows).
    p2 = prompt_learner_forward_inplace(ctx, embedding)
    jax.block_until_ready(p2)
    assert p2.shape == (n_cls, seq_len, ctx_dim)
    assert jnp.array_equal(p2, expected), "in-place kernel mismatch"

    # 2b) in-place with partial class blocks, donated at the jit boundary
    #     (donation is what keeps the aliasing copy-free in production).
    inplace_fn = jax.jit(
        functools.partial(prompt_learner_forward_inplace, block_classes=8),
        donate_argnums=(1,))
    emb30 = jnp.array(embedding[:30], copy=True)
    p2b = inplace_fn(ctx, emb30)
    jax.block_until_ready(p2b)
    del emb30  # donated
    assert jnp.array_equal(p2b, expected[:30]), "in-place kernel (partial) mismatch"

    # 2c) bf16 (halves HBM bytes; uses the vector fallback because the slab
    #     offset is not aligned to the 16-row bf16 packing).
    ctx_bf = ctx.astype(jnp.bfloat16)
    emb_bf = embedding.astype(jnp.bfloat16)
    expected_bf = reference_forward(ctx_bf, emb_bf[:, :1, :], emb_bf[:, 1 + n_ctx:, :])
    p3 = prompt_learner_forward_inplace(ctx_bf, emb_bf, block_classes=16)
    jax.block_until_ready(p3)
    assert jnp.array_equal(p3, expected_bf), "in-place bf16 kernel mismatch"

    # 2d) bf16 concat path (vector fallback).
    p4 = prompt_learner_forward(ctx_bf, emb_bf[:, :1, :], emb_bf[:, 1 + n_ctx:, :],
                                block_classes=16)
    jax.block_until_ready(p4)
    assert jnp.array_equal(p4, expected_bf), "concat bf16 kernel mismatch"

    print("KERNEL_OK")
</pallas_src>

<mosaic_0001>
module attributes {stable_mosaic.version = 11 : i64} {
  func.func @_concat_dma_kernel(%arg0: i32, %arg1: memref<32x128xf32, #tpu.memory_space<vmem>>, %arg2: memref<16x128xf32, #tpu.memory_space<vmem>>, %arg3: memref<32x60x128xf32, #tpu.memory_space<any>>, %arg4: memref<32x77x128xf32, #tpu.memory_space<vmem>>, %arg5: memref<1x!tpu.dma_semaphore, #tpu.memory_space<semaphore_mem>>) attributes {dimension_semantics = [#tpu.dimension_semantics<parallel>], iteration_bounds = array<i64: 1>, scalar_prefetch = 0 : i64, scratch_operands = 1 : i64, tpu.core_type = #tpu.core_type<tc>, window_params = [{transform_indices = @transform_0, window_bounds = array<i64: 32, 128>}, {pipeline_mode = #tpu.pipeline_mode<synchronous>, transform_indices = @transform_1, window_bounds = array<i64: 16, 128>}, {}, {transform_indices = @transform_3, window_bounds = array<i64: 32, 77, 128>}]} {
    %c32_i32 = arith.constant 32 : i32
    %0 = arith.muli %arg0, %c32_i32 : i32
    %c0_i32 = arith.constant 0 : i32
    %c0_i32_0 = arith.constant 0 : i32
    %c0_i32_1 = arith.constant 0 : i32
    %1 = tpu.memref_slice %arg3[%0, %c0_i32_0, %c0_i32_1] : memref<32x60x128xf32, #tpu.memory_space<any>> -> memref<32x60x128xf32, #tpu.memory_space<any>>
    %c0_i32_2 = arith.constant 0 : i32
    %c17_i32 = arith.constant 17 : i32
    %c0_i32_3 = arith.constant 0 : i32
    %2 = tpu.memref_slice %arg4[%c0_i32_2, %c17_i32, %c0_i32_3] : memref<32x77x128xf32, #tpu.memory_space<vmem>> -> memref<32x60x128xf32, #tpu.memory_space<vmem>>
    %3 = tpu.memref_slice %arg5[%c0_i32] : memref<1x!tpu.dma_semaphore, #tpu.memory_space<semaphore_mem>> -> memref<1x!tpu.dma_semaphore, #tpu.memory_space<semaphore_mem>>
    %4 = tpu.memref_squeeze %3 : memref<1x!tpu.dma_semaphore, #tpu.memory_space<semaphore_mem>> -> memref<!tpu.dma_semaphore, #tpu.memory_space<semaphore_mem>>
    tpu.enqueue_dma source(%1 : memref<32x60x128xf32, #tpu.memory_space<any>>) target(%2 : memref<32x60x128xf32, #tpu.memory_space<vmem>>) target_semaphore(%4 : memref<!tpu.dma_semaphore, #tpu.memory_space<semaphore_mem>>)
    %c0 = arith.constant 0 : index
    %c0_4 = arith.constant 0 : index
    %5 = vector.load %arg2[%c0, %c0_4] : memref<16x128xf32, #tpu.memory_space<vmem>>, vector<16x128xf32>
    %c0_i32_5 = arith.constant 0 : i32
    %c32_i32_6 = arith.constant 32 : i32
    %6 = arith.addi %c0_i32_5, %c32_i32_6 : i32
    %c1_i32 = arith.constant 1 : i32
    scf.for %arg6 = %c0_i32_5 to %6 step %c1_i32  : i32 {
      %11 = arith.index_cast %arg6 : i32 to index
      %c0_14 = arith.constant 0 : index
      %12 = vector.load %arg1[%11, %c0_14] : memref<32x128xf32, #tpu.memory_space<vmem>>, vector<1x128xf32>
      %13 = arith.index_cast %arg6 : i32 to index
      %c0_15 = arith.constant 0 : index
      %c0_16 = arith.constant 0 : index
      %14 = vector.load %arg4[%13, %c0_15, %c0_16] : memref<32x77x128xf32, #tpu.memory_space<vmem>>, vector<1x1x128xf32>
      %15 = vector.shape_cast %14 : vector<1x1x128xf32> to vector<1x128xf32>
      %16 = vector.shape_cast %12 : vector<1x128xf32> to vector<1x1x128xf32>
      tpu.vector_store %arg4[%13, %c0_15, %c0_16], %16 {strides = array<i32>} : memref<32x77x128xf32, #tpu.memory_space<vmem>>, vector<1x1x128xf32>,
      %17 = arith.index_cast %arg6 : i32 to index
      %c1 = arith.constant 1 : index
      %c0_17 = arith.constant 0 : index
      %18 = vector.load %arg4[%17, %c1, %c0_17] : memref<32x77x128xf32, #tpu.memory_space<vmem>>, vector<1x16x128xf32>
      %19 = vector.shape_cast %18 : vector<1x16x128xf32> to vector<16x128xf32>
      %20 = vector.shape_cast %5 : vector<16x128xf32> to vector<1x16x128xf32>
      tpu.vector_store %arg4[%17, %c1, %c0_17], %20 {strides = array<i32>} : memref<32x77x128xf32, #tpu.memory_space<vmem>>, vector<1x16x128xf32>,
    }
    %c32_i32_7 = arith.constant 32 : i32
    %c0_i32_8 = arith.constant 0 : i32
    %c0_i32_9 = arith.constant 0 : i32
    %c0_i32_10 = arith.constant 0 : i32
    %7 = tpu.memref_slice %arg3[%0, %c0_i32_9, %c0_i32_10] : memref<32x60x128xf32, #tpu.memory_space<any>> -> memref<32x60x128xf32, #tpu.memory_space<any>>
    %c0_i32_11 = arith.constant 0 : i32
    %c17_i32_12 = arith.constant 17 : i32
    %c0_i32_13 = arith.constant 0 : i32
    %8 = tpu.memref_slice %arg4[%c0_i32_11, %c17_i32_12, %c0_i32_13] : memref<32x77x128xf32, #tpu.memory_space<vmem>> -> memref<32x60x128xf32, #tpu.memory_space<vmem>>
    %9 = tpu.memref_slice %arg5[%c0_i32_8] : memref<1x!tpu.dma_semaphore, #tpu.memory_space<semaphore_mem>> -> memref<1x!tpu.dma_semaphore, #tpu.memory_space<semaphore_mem>>
    %10 = tpu.memref_squeeze %9 : memref<1x!tpu.dma_semaphore, #tpu.memory_space<semaphore_mem>> -> memref<!tpu.dma_semaphore, #tpu.memory_space<semaphore_mem>>
    tpu.wait_dma2 semaphore(%10 : memref<!tpu.dma_semaphore, #tpu.memory_space<semaphore_mem>>) src(%7 : memref<32x60x128xf32, #tpu.memory_space<any>>) dst(%8 : memref<32x60x128xf32, #tpu.memory_space<vmem>>)
    return
  }
  func.func @transform_0(%arg0: i32) -> (i32, i32) {
    %c0_i32 = arith.constant 0 : i32
    %c0_i32_0 = arith.constant 0 : i32
    return %arg0, %c0_i32 : i32, i32
  }
  func.func @transform_1(%arg0: i32) -> (i32, i32) {
    %c0_i32 = arith.constant 0 : i32
    %c0_i32_0 = arith.constant 0 : i32
    %c0_i32_1 = arith.constant 0 : i32
    return %c0_i32, %c0_i32_0 : i32, i32
  }
  func.func @transform_3(%arg0: i32) -> (i32, i32, i32) {
    %c0_i32 = arith.constant 0 : i32
    %c0_i32_0 = arith.constant 0 : i32
    %c0_i32_1 = arith.constant 0 : i32
    return %arg0, %c0_i32, %c0_i32_0 : i32, i32, i32
  }
}

</mosaic_0001>

<llo_original>
// kernel: tpu_custom_call.1
$region0: #{tpu_custom_call.1}
  #allocation0 [shape = 'u32[]', space=smem, size = 0x4, offset = 0x4, fixed_abs, tag = 'smem constant byte address 0x4 - core index']
  #allocation1 [shape = 'u32[144,128]{1,0:T(1,128)}', space=vmem, size = 0x12000, scoped, tag = 'internal scratch']
  #allocation2 [shape = 's32[1]{0}', space=sflag, size = 0x4, scoped, tag = 'scratch operand']
  #allocation3 [shape = 's32[]', space=sflag, size = 0x4, offset = 0, fixed_abs, tag = 'sflag constant byte address 0x0 - dummy sync flag']
  %s0 = inlined_call_operand.vmem [shape: f32[32,128], index: 0, kind: input, shape index: {}]
  %s1 = inlined_call_operand.vmem [shape: f32[16,128], index: 1, kind: input, shape index: {}]
  %s2 = inlined_call_operand.vmem [shape: f32[32,60,128], index: 2, kind: input, shape index: {}]
  %s3 = inlined_call_operand.vmem [shape: f32[32,77,128], index: 3, kind: output, shape index: {}]
  %s4 = sld [smem:[#allocation0]]
  $region62: #{tpu_custom_call.1} parent=0
    _
  %s6 = ssub.s32 1, %s4
  %s7 = scalar_select 0, %s6, %s4
  // Predicated region
  $region2: #{tpu_custom_call.1} parent=0 // pred_check
    _
  $region3: #{tpu_custom_call.1} parent=0 // pred_check_branch
    %9 = sbr.rel (0) target = $region5
  $region4: #{tpu_custom_call.1} parent=0 // pred_region
    _
  $region5: #{tpu_custom_call.1} parent=0 // pred_fallthru
    _
  // Predicated region
  $region6: #{tpu_custom_call.1} parent=0 // pred_check
    _
  $region7: #{tpu_custom_call.1} parent=0 // pred_check_branch
    %11 = sbr.rel (0) target = $region9
  $region8: #{tpu_custom_call.1} parent=0 // pred_region
    _
  $region9: #{tpu_custom_call.1} parent=0 // pred_fallthru
    _
  %s12 = smul.u32 0, 32
  %s13 = smul.u32 %s12, 64
  %s14 = scalar_lea.vmem %s2, %s13
  %s15 = scalar_lea.vmem %s3, 17
  %p17 = scmp.lt.u32.totalorder 60, 8
  %p18 = pneg %p17
  // Predicated region
  $region10: #{tpu_custom_call.1} parent=0 // pred_check
    _
  $region11: #{tpu_custom_call.1} parent=0 // pred_check_branch
    %20 = sbr.rel (%p17) target = $region13
  $region12: #{tpu_custom_call.1} parent=0 // pred_region
    %s97 = sand.u32 60, 7
    %p98 = scmp.eq.s32.totalorder %s97, 0
    %p99 = pneg %p98
    // Predicated region
    $region25: #{tpu_custom_call.1} parent=12 // pred_check
      _
    $region26: #{tpu_custom_call.1} parent=12 // pred_check_branch
      %101 = sbr.rel (%p98) target = $region28
    $region27: #{tpu_custom_call.1} parent=12 // pred_region
      %s102 = sand.u32 60, 7
      %s103 = ssub.s32 60, %s102
      %s104 = scalar_lea.vmem %s14, %s103
      %s105 = ssub.s32 60, %s102
      %s106 = scalar_lea.vmem %s15, %s105
      loop: start=0, step=1, limit=1
      $region29: #{tpu_custom_call.1} parent=27 // loop_pre_header
        _
      $region30: #{tpu_custom_call.1} parent=27 // loop_header
        %s108 = sphi 0, %s112
        %p109 = scmp.ge.s32.totalorder %s108, 1
        %s113 = sphi %s14, %s14
        %s114 = sphi %s15, %s15
      $region31: #{tpu_custom_call.1} parent=27 // loop_header_branch
        %111 = sbr.rel (%p109) target = $region35
      $region32: #{tpu_custom_call.1} parent=27 // loop_body
        %v115 = vld [vmem:[%s113] sm:$0xff]
        %116 = vst [vmem:[%s114] sm:$0xff] %v115
        %v117 = vld [vmem:[%s113 + $0x8] sm:$0xff]
        %118 = vst [vmem:[%s114 + $0x8] sm:$0xff] %v117
        %v119 = vld [vmem:[%s113 + $0x10] sm:$0xff]
        %120 = vst [vmem:[%s114 + $0x10] sm:$0xff] %v119
        %v121 = vld [vmem:[%s113 + $0x18] sm:$0xff]
        %122 = vst [vmem:[%s114 + $0x18] sm:$0xff] %v121
        %v123 = vld [vmem:[%s113 + $0x20] sm:$0xff]
        %124 = vst [vmem:[%s114 + $0x20] sm:$0xff] %v123
        %v125 = vld [vmem:[%s113 + $0x28] sm:$0xff]
        %126 = vst [vmem:[%s114 + $0x28] sm:$0xff] %v125
        %v127 = vld [vmem:[%s113 + $0x30] sm:$0xff]
        %128 = vst [vmem:[%s114 + $0x30] sm:$0xff] %v127
        %v129 = vld [vmem:[%s113 + $0x40] sm:$0xff]
        %130 = vst [vmem:[%s114 + $0x50] sm:$0xff] %v129
        %v131 = vld [vmem:[%s113 + $0x48] sm:$0xff]
        %132 = vst [vmem:[%s114 + $0x58] sm:$0xff] %v131
        %v133 = vld [vmem:[%s113 + $0x50] sm:$0xff]
        %134 = vst [vmem:[%s114 + $0x60] sm:$0xff] %v133
        %v135 = vld [vmem:[%s113 + $0x58] sm:$0xff]
        %136 = vst [vmem:[%s114 + $0x68] sm:$0xff] %v135
        %v137 = vld [vmem:[%s113 + $0x60] sm:$0xff]
        %138 = vst [vmem:[%s114 + $0x70] sm:$0xff] %v137
        %v139 = vld [vmem:[%s113 + $0x68] sm:$0xff]
        %140 = vst [vmem:[%s114 + $0x78] sm:$0xff] %v139
        %v141 = vld [vmem:[%s113 + $0x70] sm:$0xff]
        %142 = vst [vmem:[%s114 + $0x80] sm:$0xff] %v141
        %v143 = vld [vmem:[%s113 + $0x80] sm:$0xff]
        %144 = vst [vmem:[%s114 + $0xa0] sm:$0xff] %v143
        %v145 = vld [vmem:[%s113 + $0x88] sm:$0xff]
        %146 = vst [vmem:[%s114 + $0xa8] sm:$0xff] %v145
        %v147 = vld [vmem:[%s113 + $0x90] sm:$0xff]
        %148 = vst [vmem:[%s114 + $0xb0] sm:$0xff] %v147
        %v149 = vld [vmem:[%s113 + $0x98] sm:$0xff]
        %150 = vst [vmem:[%s114 + $0xb8] sm:$0xff] %v149
        %v151 = vld [vmem:[%s113 + $0xa0] sm:$0xff]
        %152 = vst [vmem:[%s114 + $0xc0] sm:$0xff] %v151
        %v153 = vld [vmem:[%s113 + $0xa8] sm:$0xff]
        %154 = vst [vmem:[%s114 + $0xc8] sm:$0xff] %v153
        %v155 = vld [vmem:[%s113 + $0xb0] sm:$0xff]
        %156 = vst [vmem:[%s114 + $0xd0] sm:$0xff] %v155
        %v157 = vld [vmem:[%s113 + $0xc0] sm:$0xff]
        %158 = vst [vmem:[%s114 + $0xf0] sm:$0xff] %v157
        %v159 = vld [vmem:[%s113 + $0xc8] sm:$0xff]
        %160 = vst [vmem:[%s114 + $0xf8] sm:$0xff] %v159
        %v161 = vld [vmem:[%s113 + $0xd0] sm:$0xff]
        %162 = vst [vmem:[%s114 + $0x100] sm:$0xff] %v161
        %v163 = vld [vmem:[%s113 + $0xd8] sm:$0xff]
        %164 = vst [vmem:[%s114 + $0x108] sm:$0xff] %v163
        %v165 = vld [vmem:[%s113 + $0xe0] sm:$0xff]
        %166 = vst [vmem:[%s114 + $0x110] sm:$0xff] %v165
        %v167 = vld [vmem:[%s113 + $0xe8] sm:$0xff]
        %168 = vst [vmem:[%s114 + $0x118] sm:$0xff] %v167
        %v169 = vld [vmem:[%s113 + $0xf0] sm:$0xff]
        %170 = vst [vmem:[%s114 + $0x120] sm:$0xff] %v169
        %v171 = vld [vmem:[%s113 + $0x100] sm:$0xff]
        %172 = vst [vmem:[%s114 + $0x140] sm:$0xff] %v171
        %v173 = vld [vmem:[%s113 + $0x108] sm:$0xff]
        %174 = vst [vmem:[%s114 + $0x148] sm:$0xff] %v173
        %v175 = vld [vmem:[%s113 + $0x110] sm:$0xff]
        %176 = vst [vmem:[%s114 + $0x150] sm:$0xff] %v175
        %v177 = vld [vmem:[%s113 + $0x118] sm:$0xff]
        %178 = vst [vmem:[%s114 + $0x158] sm:$0xff] %v177
        %v179 = vld [vmem:[%s113 + $0x120] sm:$0xff]
        %180 = vst [vmem:[%s114 + $0x160] sm:$0xff] %v179
        %v181 = vld [vmem:[%s113 + $0x128] sm:$0xff]
        %182 = vst [vmem:[%s114 + $0x168] sm:$0xff] %v181
        %v183 = vld [vmem:[%s113 + $0x130] sm:$0xff]
        %184 = vst [vmem:[%s114 + $0x170] sm:$0xff] %v183
        %v185 = vld [vmem:[%s113 + $0x140] sm:$0xff]
        %186 = vst [vmem:[%s114 + $0x190] sm:$0xff] %v185
        %v187 = vld [vmem:[%s113 + $0x148] sm:$0xff]
        %188 = vst [vmem:[%s114 + $0x198] sm:$0xff] %v187
        %v189 = vld [vmem:[%s113 + $0x150] sm:$0xff]
        %190 = vst [vmem:[%s114 + $0x1a0] sm:$0xff] %v189
        %v191 = vld [vmem:[%s113 + $0x158] sm:$0xff]
        %192 = vst [vmem:[%s114 + $0x1a8] sm:$0xff] %v191
        %v193 = vld [vmem:[%s113 + $0x160] sm:$0xff]
        %194 = vst [vmem:[%s114 + $0x1b0] sm:$0xff] %v193
        %v195 = vld [vmem:[%s113 + $0x168] sm:$0xff]
        %196 = vst [vmem:[%s114 + $0x1b8] sm:$0xff] %v195
        %v197 = vld [vmem:[%s113 + $0x170] sm:$0xff]
        %198 = vst [vmem:[%s114 + $0x1c0] sm:$0xff] %v197
        %v199 = vld [vmem:[%s113 + $0x180] sm:$0xff]
        %200 = vst [vmem:[%s114 + $0x1e0] sm:$0xff] %v199
        %v201 = vld [vmem:[%s113 + $0x188] sm:$0xff]
        %202 = vst [vmem:[%s114 + $0x1e8] sm:$0xff] %v201
        %v203 = vld [vmem:[%s113 + $0x190] sm:$0xff]
        %204 = vst [vmem:[%s114 + $0x1f0] sm:$0xff] %v203
        %v205 = vld [vmem:[%s113 + $0x198] sm:$0xff]
        %206 = vst [vmem:[%s114 + $0x1f8] sm:$0xff] %v205
        %v207 = vld [vmem:[%s113 + $0x1a0] sm:$0xff]
        %208 = vst [vmem:[%s114 + $0x200] sm:$0xff] %v207
        %v209 = vld [vmem:[%s113 + $0x1a8] sm:$0xff]
        %210 = vst [vmem:[%s114 + $0x208] sm:$0xff] %v209
        %v211 = vld [vmem:[%s113 + $0x1b0] sm:$0xff]
        %212 = vst [vmem:[%s114 + $0x210] sm:$0xff] %v211
        %v213 = vld [vmem:[%s113 + $0x1c0] sm:$0xff]
        %214 = vst [vmem:[%s114 + $0x230] sm:$0xff] %v213
        %v215 = vld [vmem:[%s113 + $0x1c8] sm:$0xff]
        %216 = vst [vmem:[%s114 + $0x238] sm:$0xff] %v215
        %v217 = vld [vmem:[%s113 + $0x1d0] sm:$0xff]
        %218 = vst [vmem:[%s114 + $0x240] sm:$0xff] %v217
        %v219 = vld [vmem:[%s113 + $0x1d8] sm:$0xff]
        %220 = vst [vmem:[%s114 + $0x248] sm:$0xff] %v219
        %v221 = vld [vmem:[%s113 + $0x1e0] sm:$0xff]
        %222 = vst [vmem:[%s114 + $0x250] sm:$0xff] %v221
        %v223 = vld [vmem:[%s113 + $0x1e8] sm:$0xff]
        %224 = vst [vmem:[%s114 + $0x258] sm:$0xff] %v223
        %v225 = vld [vmem:[%s113 + $0x1f0] sm:$0xff]
        %226 = vst [vmem:[%s114 + $0x260] sm:$0xff] %v225
        %v227 = vld [vmem:[%s113 + $0x200] sm:$0xff]
        %228 = vst [vmem:[%s114 + $0x280] sm:$0xff] %v227
        %v229 = vld [vmem:[%s113 + $0x208] sm:$0xff]
        %230 = vst [vmem:[%s114 + $0x288] sm:$0xff] %v229
        %v231 = vld [vmem:[%s113 + $0x210] sm:$0xff]
        %232 = vst [vmem:[%s114 + $0x290] sm:$0xff] %v231
        %v233 = vld [vmem:[%s113 + $0x218] sm:$0xff]
        %234 = vst [vmem:[%s114 + $0x298] sm:$0xff] %v233
        %v235 = vld [vmem:[%s113 + $0x220] sm:$0xff]
        %236 = vst [vmem:[%s114 + $0x2a0] sm:$0xff] %v235
        %v237 = vld [vmem:[%s113 + $0x228] sm:$0xff]
        %238 = vst [vmem:[%s114 + $0x2a8] sm:$0xff] %v237
        %v239 = vld [vmem:[%s113 + $0x230] sm:$0xff]
        %240 = vst [vmem:[%s114 + $0x2b0] sm:$0xff] %v239
        %v241 = vld [vmem:[%s113 + $0x240] sm:$0xff]
        %242 = vst [vmem:[%s114 + $0x2d0] sm:$0xff] %v241
        %v243 = vld [vmem:[%s113 + $0x248] sm:$0xff]
        %244 = vst [vmem:[%s114 + $0x2d8] sm:$0xff] %v243
        %v245 = vld [vmem:[%s113 + $0x250] sm:$0xff]
        %246 = vst [vmem:[%s114 + $0x2e0] sm:$0xff] %v245
        %v247 = vld [vmem:[%s113 + $0x258] sm:$0xff]
        %248 = vst [vmem:[%s114 + $0x2e8] sm:$0xff] %v247
        %v249 = vld [vmem:[%s113 + $0x260] sm:$0xff]
        %250 = vst [vmem:[%s114 + $0x2f0] sm:$0xff] %v249
        %v251 = vld [vmem:[%s113 + $0x268] sm:$0xff]
        %252 = vst [vmem:[%s114 + $0x2f8] sm:$0xff] %v251
        %v253 = vld [vmem:[%s113 + $0x270] sm:$0xff]
        %254 = vst [vmem:[%s114 + $0x300] sm:$0xff] %v253
        %v255 = vld [vmem:[%s113 + $0x280] sm:$0xff]
        %256 = vst [vmem:[%s114 + $0x320] sm:$0xff] %v255
        %v257 = vld [vmem:[%s113 + $0x288] sm:$0xff]
        %258 = vst [vmem:[%s114 + $0x328] sm:$0xff] %v257
        %v259 = vld [vmem:[%s113 + $0x290] sm:$0xff]
        %260 = vst [vmem:[%s114 + $0x330] sm:$0xff] %v259
        %v261 = vld [vmem:[%s113 + $0x298] sm:$0xff]
        %262 = vst [vmem:[%s114 + $0x338] sm:$0xff] %v261
        %v263 = vld [vmem:[%s113 + $0x2a0] sm:$0xff]
        %264 = vst [vmem:[%s114 + $0x340] sm:$0xff] %v263
        %v265 = vld [vmem:[%s113 + $0x2a8] sm:$0xff]
        %266 = vst [vmem:[%s114 + $0x348] sm:$0xff] %v265
        %v267 = vld [vmem:[%s113 + $0x2b0] sm:$0xff]
        %268 = vst [vmem:[%s114 + $0x350] sm:$0xff] %v267
        %v269 = vld [vmem:[%s113 + $0x2c0] sm:$0xff]
        %270 = vst [vmem:[%s114 + $0x370] sm:$0xff] %v269
        %v271 = vld [vmem:[%s113 + $0x2c8] sm:$0xff]
        %272 = vst [vmem:[%s114 + $0x378] sm:$0xff] %v271
        %v273 = vld [vmem:[%s113 + $0x2d0] sm:$0xff]
        %274 = vst [vmem:[%s114 + $0x380] sm:$0xff] %v273
        %v275 = vld [vmem:[%s113 + $0x2d8] sm:$0xff]
        %276 = vst [vmem:[%s114 + $0x388] sm:$0xff] %v275
        %v277 = vld [vmem:[%s113 + $0x2e0] sm:$0xff]
        %278 = vst [vmem:[%s114 + $0x390] sm:$0xff] %v277
        %v279 = vld [vmem:[%s113 + $0x2e8] sm:$0xff]
        %280 = vst [vmem:[%s114 + $0x398] sm:$0xff] %v279
        %v281 = vld [vmem:[%s113 + $0x2f0] sm:$0xff]
        %282 = vst [vmem:[%s114 + $0x3a0] sm:$0xff] %v281
        %v283 = vld [vmem:[%s113 + $0x300] sm:$0xff]
        %284 = vst [vmem:[%s114 + $0x3c0] sm:$0xff] %v283
        %v285 = vld [vmem:[%s113 + $0x308] sm:$0xff]
        %286 = vst [vmem:[%s114 + $0x3c8] sm:$0xff] %v285
        %v287 = vld [vmem:[%s113 + $0x310] sm:$0xff]
        %288 = vst [vmem:[%s114 + $0x3d0] sm:$0xff] %v287
        %v289 = vld [vmem:[%s113 + $0x318] sm:$0xff]
        %290 = vst [vmem:[%s114 + $0x3d8] sm:$0xff] %v289
        %v291 = vld [vmem:[%s113 + $0x320] sm:$0xff]
        %292 = vst [vmem:[%s114 + $0x3e0] sm:$0xff] %v291
        %v293 = vld [vmem:[%s113 + $0x328] sm:$0xff]
        %294 = vst [vmem:[%s114 + $0x3e8] sm:$0xff] %v293
        %v295 = vld [vmem:[%s113 + $0x330] sm:$0xff]
        %296 = vst [vmem:[%s114 + $0x3f0] sm:$0xff] %v295
        %v297 = vld [vmem:[%s113 + $0x340] sm:$0xff]
        %298 = vst [vmem:[%s114 + $0x410] sm:$0xff] %v297
        %v299 = vld [vmem:[%s113 + $0x348] sm:$0xff]
        %300 = vst [vmem:[%s114 + $0x418] sm:$0xff] %v299
        %v301 = vld [vmem:[%s113 + $0x350] sm:$0xff]
        %302 = vst [vmem:[%s114 + $0x420] sm:$0xff] %v301
        %v303 = vld [vmem:[%s113 + $0x358] sm:$0xff]
        %304 = vst [vmem:[%s114 + $0x428] sm:$0xff] %v303
        %v305 = vld [vmem:[%s113 + $0x360] sm:$0xff]
        %306 = vst [vmem:[%s114 + $0x430] sm:$0xff] %v305
        %v307 = vld [vmem:[%s113 + $0x368] sm:$0xff]
        %308 = vst [vmem:[%s114 + $0x438] sm:$0xff] %v307
        %v309 = vld [vmem:[%s113 + $0x370] sm:$0xff]
        %310 = vst [vmem:[%s114 + $0x440] sm:$0xff] %v309
        %v311 = vld [vmem:[%s113 + $0x380] sm:$0xff]
        %312 = vst [vmem:[%s114 + $0x460] sm:$0xff] %v311
        %v313 = vld [vmem:[%s113 + $0x388] sm:$0xff]
        %314 = vst [vmem:[%s114 + $0x468] sm:$0xff] %v313
        %v315 = vld [vmem:[%s113 + $0x390] sm:$0xff]
        %316 = vst [vmem:[%s114 + $0x470] sm:$0xff] %v315
        %v317 = vld [vmem:[%s113 + $0x398] sm:$0xff]
        %318 = vst [vmem:[%s114 + $0x478] sm:$0xff] %v317
        %v319 = vld [vmem:[%s113 + $0x3a0] sm:$0xff]
        %320 = vst [vmem:[%s114 + $0x480] sm:$0xff] %v319
        %v321 = vld [vmem:[%s113 + $0x3a8] sm:$0xff]
        %322 = vst [vmem:[%s114 + $0x488] sm:$0xff] %v321
        %v323 = vld [vmem:[%s113 + $0x3b0] sm:$0xff]
        %324 = vst [vmem:[%s114 + $0x490] sm:$0xff] %v323
        %v325 = vld [vmem:[%s113 + $0x3c0] sm:$0xff]
        %326 = vst [vmem:[%s114 + $0x4b0] sm:$0xff] %v325
        %v327 = vld [vmem:[%s113 + $0x3c8] sm:$0xff]
        %328 = vst [vmem:[%s114 + $0x4b8] sm:$0xff] %v327
        %v329 = vld [vmem:[%s113 + $0x3d0] sm:$0xff]
        %330 = vst [vmem:[%s114 + $0x4c0] sm:$0xff] %v329
        %v331 = vld [vmem:[%s113 + $0x3d8] sm:$0xff]
        %332 = vst [vmem:[%s114 + $0x4c8] sm:$0xff] %v331
        %v333 = vld [vmem:[%s113 + $0x3e0] sm:$0xff]
        %334 = vst [vmem:[%s114 + $0x4d0] sm:$0xff] %v333
        %v335 = vld [vmem:[%s113 + $0x3e8] sm:$0xff]
        %336 = vst [vmem:[%s114 + $0x4d8] sm:$0xff] %v335
        %v337 = vld [vmem:[%s113 + $0x3f0] sm:$0xff]
        %338 = vst [vmem:[%s114 + $0x4e0] sm:$0xff] %v337
        %v339 = vld [vmem:[%s113 + $0x400] sm:$0xff]
        %340 = vst [vmem:[%s114 + $0x500] sm:$0xff] %v339
        %v341 = vld [vmem:[%s113 + $0x408] sm:$0xff]
        %342 = vst [vmem:[%s114 + $0x508] sm:$0xff] %v341
        %v343 = vld [vmem:[%s113 + $0x410] sm:$0xff]
        %344 = vst [vmem:[%s114 + $0x510] sm:$0xff] %v343
        %v345 = vld [vmem:[%s113 + $0x418] sm:$0xff]
        %346 = vst [vmem:[%s114 + $0x518] sm:$0xff] %v345
        %v347 = vld [vmem:[%s113 + $0x420] sm:$0xff]
        %348 = vst [vmem:[%s114 + $0x520] sm:$0xff] %v347
        %v349 = vld [vmem:[%s113 + $0x428] sm:$0xff]
        %350 = vst [vmem:[%s114 + $0x528] sm:$0xff] %v349
        %v351 = vld [vmem:[%s113 + $0x430] sm:$0xff]
        %352 = vst [vmem:[%s114 + $0x530] sm:$0xff] %v351
        %v353 = vld [vmem:[%s113 + $0x440] sm:$0xff]
        %354 = vst [vmem:[%s114 + $0x550] sm:$0xff] %v353
        %v355 = vld [vmem:[%s113 + $0x448] sm:$0xff]
        %356 = vst [vmem:[%s114 + $0x558] sm:$0xff] %v355
        %v357 = vld [vmem:[%s113 + $0x450] sm:$0xff]
        %358 = vst [vmem:[%s114 + $0x560] sm:$0xff] %v357
        %v359 = vld [vmem:[%s113 + $0x458] sm:$0xff]
        %360 = vst [vmem:[%s114 + $0x568] sm:$0xff] %v359
        %v361 = vld [vmem:[%s113 + $0x460] sm:$0xff]
        %362 = vst [vmem:[%s114 + $0x570] sm:$0xff] %v361
        %v363 = vld [vmem:[%s113 + $0x468] sm:$0xff]
        %364 = vst [vmem:[%s114 + $0x578] sm:$0xff] %v363
        %v365 = vld [vmem:[%s113 + $0x470] sm:$0xff]
        %366 = vst [vmem:[%s114 + $0x580] sm:$0xff] %v365
        %v367 = vld [vmem:[%s113 + $0x480] sm:$0xff]
        %368 = vst [vmem:[%s114 + $0x5a0] sm:$0xff] %v367
        %v369 = vld [vmem:[%s113 + $0x488] sm:$0xff]
        %370 = vst [vmem:[%s114 + $0x5a8] sm:$0xff] %v369
        %v371 = vld [vmem:[%s113 + $0x490] sm:$0xff]
        %372 = vst [vmem:[%s114 + $0x5b0] sm:$0xff] %v371
        %v373 = vld [vmem:[%s113 + $0x498] sm:$0xff]
        %374 = vst [vmem:[%s114 + $0x5b8] sm:$0xff] %v373
        %v375 = vld [vmem:[%s113 + $0x4a0] sm:$0xff]
        %376 = vst [vmem:[%s114 + $0x5c0] sm:$0xff] %v375
        %v377 = vld [vmem:[%s113 + $0x4a8] sm:$0xff]
        %378 = vst [vmem:[%s114 + $0x5c8] sm:$0xff] %v377
        %v379 = vld [vmem:[%s113 + $0x4b0] sm:$0xff]
        %380 = vst [vmem:[%s114 + $0x5d0] sm:$0xff] %v379
        %v381 = vld [vmem:[%s113 + $0x4c0] sm:$0xff]
        %382 = vst [vmem:[%s114 + $0x5f0] sm:$0xff] %v381
        %v383 = vld [vmem:[%s113 + $0x4c8] sm:$0xff]
        %384 = vst [vmem:[%s114 + $0x5f8] sm:$0xff] %v383
        %v385 = vld [vmem:[%s113 + $0x4d0] sm:$0xff]
        %386 = vst [vmem:[%s114 + $0x600] sm:$0xff] %v385
        %v387 = vld [vmem:[%s113 + $0x4d8] sm:$0xff]
        %388 = vst [vmem:[%s114 + $0x608] sm:$0xff] %v387
        %v389 = vld [vmem:[%s113 + $0x4e0] sm:$0xff]
        %390 = vst [vmem:[%s114 + $0x610] sm:$0xff] %v389
        %v391 = vld [vmem:[%s113 + $0x4e8] sm:$0xff]
        %392 = vst [vmem:[%s114 + $0x618] sm:$0xff] %v391
        %v393 = vld [vmem:[%s113 + $0x4f0] sm:$0xff]
        %394 = vst [vmem:[%s114 + $0x620] sm:$0xff] %v393
        %v395 = vld [vmem:[%s113 + $0x500] sm:$0xff]
        %396 = vst [vmem:[%s114 + $0x640] sm:$0xff] %v395
        %v397 = vld [vmem:[%s113 + $0x508] sm:$0xff]
        %398 = vst [vmem:[%s114 + $0x648] sm:$0xff] %v397
        %v399 = vld [vmem:[%s113 + $0x510] sm:$0xff]
        %400 = vst [vmem:[%s114 + $0x650] sm:$0xff] %v399
        %v401 = vld [vmem:[%s113 + $0x518] sm:$0xff]
        %402 = vst [vmem:[%s114 + $0x658] sm:$0xff] %v401
        %v403 = vld [vmem:[%s113 + $0x520] sm:$0xff]
        %404 = vst [vmem:[%s114 + $0x660] sm:$0xff] %v403
        %v405 = vld [vmem:[%s113 + $0x528] sm:$0xff]
        %406 = vst [vmem:[%s114 + $0x668] sm:$0xff] %v405
        %v407 = vld [vmem:[%s113 + $0x530] sm:$0xff]
        %408 = vst [vmem:[%s114 + $0x670] sm:$0xff] %v407
        %v409 = vld [vmem:[%s113 + $0x540] sm:$0xff]
        %410 = vst [vmem:[%s114 + $0x690] sm:$0xff] %v409
        %v411 = vld [vmem:[%s113 + $0x548] sm:$0xff]
        %412 = vst [vmem:[%s114 + $0x698] sm:$0xff] %v411
        %v413 = vld [vmem:[%s113 + $0x550] sm:$0xff]
        %414 = vst [vmem:[%s114 + $0x6a0] sm:$0xff] %v413
        %v415 = vld [vmem:[%s113 + $0x558] sm:$0xff]
        %416 = vst [vmem:[%s114 + $0x6a8] sm:$0xff] %v415
        %v417 = vld [vmem:[%s113 + $0x560] sm:$0xff]
        %418 = vst [vmem:[%s114 + $0x6b0] sm:$0xff] %v417
        %v419 = vld [vmem:[%s113 + $0x568] sm:$0xff]
        %420 = vst [vmem:[%s114 + $0x6b8] sm:$0xff] %v419
        %v421 = vld [vmem:[%s113 + $0x570] sm:$0xff]
        %422 = vst [vmem:[%s114 + $0x6c0] sm:$0xff] %v421
        %v423 = vld [vmem:[%s113 + $0x580] sm:$0xff]
        %424 = vst [vmem:[%s114 + $0x6e0] sm:$0xff] %v423
        %v425 = vld [vmem:[%s113 + $0x588] sm:$0xff]
        %426 = vst [vmem:[%s114 + $0x6e8] sm:$0xff] %v425
        %v427 = vld [vmem:[%s113 + $0x590] sm:$0xff]
        %428 = vst [vmem:[%s114 + $0x6f0] sm:$0xff] %v427
        %v429 = vld [vmem:[%s113 + $0x598] sm:$0xff]
        %430 = vst [vmem:[%s114 + $0x6f8] sm:$0xff] %v429
        %v431 = vld [vmem:[%s113 + $0x5a0] sm:$0xff]
        %432 = vst [vmem:[%s114 + $0x700] sm:$0xff] %v431
        %v433 = vld [vmem:[%s113 + $0x5a8] sm:$0xff]
        %434 = vst [vmem:[%s114 + $0x708] sm:$0xff] %v433
        %v435 = vld [vmem:[%s113 + $0x5b0] sm:$0xff]
        %436 = vst [vmem:[%s114 + $0x710] sm:$0xff] %v435
        %v437 = vld [vmem:[%s113 + $0x5c0] sm:$0xff]
        %438 = vst [vmem:[%s114 + $0x730] sm:$0xff] %v437
        %v439 = vld [vmem:[%s113 + $0x5c8] sm:$0xff]
        %440 = vst [vmem:[%s114 + $0x738] sm:$0xff] %v439
        %v441 = vld [vmem:[%s113 + $0x5d0] sm:$0xff]
        %442 = vst [vmem:[%s114 + $0x740] sm:$0xff] %v441
        %v443 = vld [vmem:[%s113 + $0x5d8] sm:$0xff]
        %444 = vst [vmem:[%s114 + $0x748] sm:$0xff] %v443
        %v445 = vld [vmem:[%s113 + $0x5e0] sm:$0xff]
        %446 = vst [vmem:[%s114 + $0x750] sm:$0xff] %v445
        %v447 = vld [vmem:[%s113 + $0x5e8] sm:$0xff]
        %448 = vst [vmem:[%s114 + $0x758] sm:$0xff] %v447
        %v449 = vld [vmem:[%s113 + $0x5f0] sm:$0xff]
        %450 = vst [vmem:[%s114 + $0x760] sm:$0xff] %v449
        %v451 = vld [vmem:[%s113 + $0x600] sm:$0xff]
        %452 = vst [vmem:[%s114 + $0x780] sm:$0xff] %v451
        %v453 = vld [vmem:[%s113 + $0x608] sm:$0xff]
        %454 = vst [vmem:[%s114 + $0x788] sm:$0xff] %v453
        %v455 = vld [vmem:[%s113 + $0x610] sm:$0xff]
        %456 = vst [vmem:[%s114 + $0x790] sm:$0xff] %v455
        %v457 = vld [vmem:[%s113 + $0x618] sm:$0xff]
        %458 = vst [vmem:[%s114 + $0x798] sm:$0xff] %v457
        %v459 = vld [vmem:[%s113 + $0x620] sm:$0xff]
        %460 = vst [vmem:[%s114 + $0x7a0] sm:$0xff] %v459
        %v461 = vld [vmem:[%s113 + $0x628] sm:$0xff]
        %462 = vst [vmem:[%s114 + $0x7a8] sm:$0xff] %v461
        %v463 = vld [vmem:[%s113 + $0x630] sm:$0xff]
        %464 = vst [vmem:[%s114 + $0x7b0] sm:$0xff] %v463
        %v465 = vld [vmem:[%s113 + $0x640] sm:$0xff]
        %466 = vst [vmem:[%s114 + $0x7d0] sm:$0xff] %v465
        %v467 = vld [vmem:[%s113 + $0x648] sm:$0xff]
        %468 = vst [vmem:[%s114 + $0x7d8] sm:$0xff] %v467
        %v469 = vld [vmem:[%s113 + $0x650] sm:$0xff]
        %470 = vst [vmem:[%s114 + $0x7e0] sm:$0xff] %v469
        %v471 = vld [vmem:[%s113 + $0x658] sm:$0xff]
        %472 = vst [vmem:[%s114 + $0x7e8] sm:$0xff] %v471
        %v473 = vld [vmem:[%s113 + $0x660] sm:$0xff]
        %474 = vst [vmem:[%s114 + $0x7f0] sm:$0xff] %v473
        %v475 = vld [vmem:[%s113 + $0x668] sm:$0xff]
        %476 = vst [vmem:[%s114 + $0x7f8] sm:$0xff] %v475
        %v477 = vld [vmem:[%s113 + $0x670] sm:$0xff]
        %478 = vst [vmem:[%s114 + $0x800] sm:$0xff] %v477
        %v479 = vld [vmem:[%s113 + $0x680] sm:$0xff]
        %480 = vst [vmem:[%s114 + $0x820] sm:$0xff] %v479
        %v481 = vld [vmem:[%s113 + $0x688] sm:$0xff]
        %482 = vst [vmem:[%s114 + $0x828] sm:$0xff] %v481
        %v483 = vld [vmem:[%s113 + $0x690] sm:$0xff]
        %484 = vst [vmem:[%s114 + $0x830] sm:$0xff] %v483
        %v485 = vld [vmem:[%s113 + $0x698] sm:$0xff]
        %486 = vst [vmem:[%s114 + $0x838] sm:$0xff] %v485
        %v487 = vld [vmem:[%s113 + $0x6a0] sm:$0xff]
        %488 = vst [vmem:[%s114 + $0x840] sm:$0xff] %v487
        %v489 = vld [vmem:[%s113 + $0x6a8] sm:$0xff]
        %490 = vst [vmem:[%s114 + $0x848] sm:$0xff] %v489
        %v491 = vld [vmem:[%s113 + $0x6b0] sm:$0xff]
        %492 = vst [vmem:[%s114 + $0x850] sm:$0xff] %v491
        %v493 = vld [vmem:[%s113 + $0x6c0] sm:$0xff]
        %494 = vst [vmem:[%s114 + $0x870] sm:$0xff] %v493
        %v495 = vld [vmem:[%s113 + $0x6c8] sm:$0xff]
        %496 = vst [vmem:[%s114 + $0x878] sm:$0xff] %v495
        %v497 = vld [vmem:[%s113 + $0x6d0] sm:$0xff]
        %498 = vst [vmem:[%s114 + $0x880] sm:$0xff] %v497
        %v499 = vld [vmem:[%s113 + $0x6d8] sm:$0xff]
        %500 = vst [vmem:[%s114 + $0x888] sm:$0xff] %v499
        %v501 = vld [vmem:[%s113 + $0x6e0] sm:$0xff]
        %502 = vst [vmem:[%s114 + $0x890] sm:$0xff] %v501
        %v503 = vld [vmem:[%s113 + $0x6e8] sm:$0xff]
        %504 = vst [vmem:[%s114 + $0x898] sm:$0xff] %v503
        %v505 = vld [vmem:[%s113 + $0x6f0] sm:$0xff]
        %506 = vst [vmem:[%s114 + $0x8a0] sm:$0xff] %v505
        %v507 = vld [vmem:[%s113 + $0x700] sm:$0xff]
        %508 = vst [vmem:[%s114 + $0x8c0] sm:$0xff] %v507
        %v509 = vld [vmem:[%s113 + $0x708] sm:$0xff]
        %510 = vst [vmem:[%s114 + $0x8c8] sm:$0xff] %v509
        %v511 = vld [vmem:[%s113 + $0x710] sm:$0xff]
        %512 = vst [vmem:[%s114 + $0x8d0] sm:$0xff] %v511
        %v513 = vld [vmem:[%s113 + $0x718] sm:$0xff]
        %514 = vst [vmem:[%s114 + $0x8d8] sm:$0xff] %v513
        %v515 = vld [vmem:[%s113 + $0x720] sm:$0xff]
        %516 = vst [vmem:[%s114 + $0x8e0] sm:$0xff] %v515
        %v517 = vld [vmem:[%s113 + $0x728] sm:$0xff]
        %518 = vst [vmem:[%s114 + $0x8e8] sm:$0xff] %v517
        %v519 = vld [vmem:[%s113 + $0x730] sm:$0xff]
        %520 = vst [vmem:[%s114 + $0x8f0] sm:$0xff] %v519
        %v521 = vld [vmem:[%s113 + $0x740] sm:$0xff]
        %522 = vst [vmem:[%s114 + $0x910] sm:$0xff] %v521
        %v523 = vld [vmem:[%s113 + $0x748] sm:$0xff]
        %524 = vst [vmem:[%s114 + $0x918] sm:$0xff] %v523
        %v525 = vld [vmem:[%s113 + $0x750] sm:$0xff]
        %526 = vst [vmem:[%s114 + $0x920] sm:$0xff] %v525
        %v527 = vld [vmem:[%s113 + $0x758] sm:$0xff]
        %528 = vst [vmem:[%s114 + $0x928] sm:$0xff] %v527
        %v529 = vld [vmem:[%s113 + $0x760] sm:$0xff]
        %530 = vst [vmem:[%s114 + $0x930] sm:$0xff] %v529
        %v531 = vld [vmem:[%s113 + $0x768] sm:$0xff]
        %532 = vst [vmem:[%s114 + $0x938] sm:$0xff] %v531
        %v533 = vld [vmem:[%s113 + $0x770] sm:$0xff]
        %534 = vst [vmem:[%s114 + $0x940] sm:$0xff] %v533
        %v535 = vld [vmem:[%s113 + $0x780] sm:$0xff]
        %536 = vst [vmem:[%s114 + $0x960] sm:$0xff] %v535
        %v537 = vld [vmem:[%s113 + $0x788] sm:$0xff]
        %538 = vst [vmem:[%s114 + $0x968] sm:$0xff] %v537
        %v539 = vld [vmem:[%s113 + $0x790] sm:$0xff]
        %540 = vst [vmem:[%s114 + $0x970] sm:$0xff] %v539
        %v541 = vld [vmem:[%s113 + $0x798] sm:$0xff]
        %542 = vst [vmem:[%s114 + $0x978] sm:$0xff] %v541
        %v543 = vld [vmem:[%s113 + $0x7a0] sm:$0xff]
        %544 = vst [vmem:[%s114 + $0x980] sm:$0xff] %v543
        %v545 = vld [vmem:[%s113 + $0x7a8] sm:$0xff]
        %546 = vst [vmem:[%s114 + $0x988] sm:$0xff] %v545
        %v547 = vld [vmem:[%s113 + $0x7b0] sm:$0xff]
        %548 = vst [vmem:[%s114 + $0x990] sm:$0xff] %v547
        %v549 = vld [vmem:[%s113 + $0x7c0] sm:$0xff]
        %550 = vst [vmem:[%s114 + $0x9b0] sm:$0xff] %v549
        %v551 = vld [vmem:[%s113 + $0x7c8] sm:$0xff]
        %552 = vst [vmem:[%s114 + $0x9b8] sm:$0xff] %v551
        %v553 = vld [vmem:[%s113 + $0x7d0] sm:$0xff]
        %554 = vst [vmem:[%s114 + $0x9c0] sm:$0xff] %v553
        %v555 = vld [vmem:[%s113 + $0x7d8] sm:$0xff]
        %556 = vst [vmem:[%s114 + $0x9c8] sm:$0xff] %v555
        %v557 = vld [vmem:[%s113 + $0x7e0] sm:$0xff]
        %558 = vst [vmem:[%s114 + $0x9d0] sm:$0xff] %v557
        %v559 = vld [vmem:[%s113 + $0x7e8] sm:$0xff]
        %560 = vst [vmem:[%s114 + $0x9d8] sm:$0xff] %v559
        %v561 = vld [vmem:[%s113 + $0x7f0] sm:$0xff]
        %562 = vst [vmem:[%s114 + $0x9e0] sm:$0xff] %v561
      $region33: #{tpu_custom_call.1} parent=27 // loop_footer
        %s112 = sadd.s32 1, %s108
      $region34: #{tpu_custom_call.1} parent=27 // loop_footer_branch
        %107 = sbr.rel target = $region30
      $region35: #{tpu_custom_call.1} parent=27 // loop_exit
        _
      %s563 = sshllo.u32 0, %s102
      loop: start=0, step=1, limit=1
      $region36: #{tpu_custom_call.1} parent=27 // loop_pre_header
        _
      $region37: #{tpu_custom_call.1} parent=27 // loop_header
        %s565 = sphi 0, %s569
        %p566 = scmp.ge.s32.totalorder %s565, 1
        %s570 = sphi %s104, %s104
        %s571 = sphi %s106, %s106
      $region38: #{tpu_custom_call.1} parent=27 // loop_header_branch
        %568 = sbr.rel (%p566) target = $region42
      $region39: #{tpu_custom_call.1} parent=27 // loop_body
        %v572 = vld [vmem:[%s570] sm:%s563]
        %573 = vst [vmem:[%s571] sm:%s563] %v572
        %v574 = vld [vmem:[%s570 + $0x40] sm:%s563]
        %575 = vst [vmem:[%s571 + $0x50] sm:%s563] %v574
        %v576 = vld [vmem:[%s570 + $0x80] sm:%s563]
        %577 = vst [vmem:[%s571 + $0xa0] sm:%s563] %v576
        %v578 = vld [vmem:[%s570 + $0xc0] sm:%s563]
        %579 = vst [vmem:[%s571 + $0xf0] sm:%s563] %v578
        %v580 = vld [vmem:[%s570 + $0x100] sm:%s563]
        %581 = vst [vmem:[%s571 + $0x140] sm:%s563] %v580
        %v582 = vld [vmem:[%s570 + $0x140] sm:%s563]
        %583 = vst [vmem:[%s571 + $0x190] sm:%s563] %v582
        %v584 = vld [vmem:[%s570 + $0x180] sm:%s563]
        %585 = vst [vmem:[%s571 + $0x1e0] sm:%s563] %v584
        %v586 = vld [vmem:[%s570 + $0x1c0] sm:%s563]
        %587 = vst [vmem:[%s571 + $0x230] sm:%s563] %v586
        %v588 = vld [vmem:[%s570 + $0x200] sm:%s563]
        %589 = vst [vmem:[%s571 + $0x280] sm:%s563] %v588
        %v590 = vld [vmem:[%s570 + $0x240] sm:%s563]
        %591 = vst [vmem:[%s571 + $0x2d0] sm:%s563] %v590
        %v592 = vld [vmem:[%s570 + $0x280] sm:%s563]
        %593 = vst [vmem:[%s571 + $0x320] sm:%s563] %v592
        %v594 = vld [vmem:[%s570 + $0x2c0] sm:%s563]
        %595 = vst [vmem:[%s571 + $0x370] sm:%s563] %v594
        %v596 = vld [vmem:[%s570 + $0x300] sm:%s563]
        %597 = vst [vmem:[%s571 + $0x3c0] sm:%s563] %v596
        %v598 = vld [vmem:[%s570 + $0x340] sm:%s563]
        %599 = vst [vmem:[%s571 + $0x410] sm:%s563] %v598
        %v600 = vld [vmem:[%s570 + $0x380] sm:%s563]
        %601 = vst [vmem:[%s571 + $0x460] sm:%s563] %v600
        %v602 = vld [vmem:[%s570 + $0x3c0] sm:%s563]
        %603 = vst [vmem:[%s571 + $0x4b0] sm:%s563] %v602
        %v604 = vld [vmem:[%s570 + $0x400] sm:%s563]
        %605 = vst [vmem:[%s571 + $0x500] sm:%s563] %v604
        %v606 = vld [vmem:[%s570 + $0x440] sm:%s563]
        %607 = vst [vmem:[%s571 + $0x550] sm:%s563] %v606
        %v608 = vld [vmem:[%s570 + $0x480] sm:%s563]
        %609 = vst [vmem:[%s571 + $0x5a0] sm:%s563] %v608
        %v610 = vld [vmem:[%s570 + $0x4c0] sm:%s563]
        %611 = vst [vmem:[%s571 + $0x5f0] sm:%s563] %v610
        %v612 = vld [vmem:[%s570 + $0x500] sm:%s563]
        %613 = vst [vmem:[%s571 + $0x640] sm:%s563] %v612
        %v614 = vld [vmem:[%s570 + $0x540] sm:%s563]
        %615 = vst [vmem:[%s571 + $0x690] sm:%s563] %v614
        %v616 = vld [vmem:[%s570 + $0x580] sm:%s563]
        %617 = vst [vmem:[%s571 + $0x6e0] sm:%s563] %v616
        %v618 = vld [vmem:[%s570 + $0x5c0] sm:%s563]
        %619 = vst [vmem:[%s571 + $0x730] sm:%s563] %v618
        %v620 = vld [vmem:[%s570 + $0x600] sm:%s563]
        %621 = vst [vmem:[%s571 + $0x780] sm:%s563] %v620
        %v622 = vld [vmem:[%s570 + $0x640] sm:%s563]
        %623 = vst [vmem:[%s571 + $0x7d0] sm:%s563] %v622
        %v624 = vld [vmem:[%s570 + $0x680] sm:%s563]
        %625 = vst [vmem:[%s571 + $0x820] sm:%s563] %v624
        %v626 = vld [vmem:[%s570 + $0x6c0] sm:%s563]
        %627 = vst [vmem:[%s571 + $0x870] sm:%s563] %v626
        %v628 = vld [vmem:[%s570 + $0x700] sm:%s563]
        %629 = vst [vmem:[%s571 + $0x8c0] sm:%s563] %v628
        %v630 = vld [vmem:[%s570 + $0x740] sm:%s563]
        %631 = vst [vmem:[%s571 + $0x910] sm:%s563] %v630
        %v632 = vld [vmem:[%s570 + $0x780] sm:%s563]
        %633 = vst [vmem:[%s571 + $0x960] sm:%s563] %v632
        %v634 = vld [vmem:[%s570 + $0x7c0] sm:%s563]
        %635 = vst [vmem:[%s571 + $0x9b0] sm:%s563] %v634
      $region40: #{tpu_custom_call.1} parent=27 // loop_footer
        %s569 = sadd.s32 1, %s565
      $region41: #{tpu_custom_call.1} parent=27 // loop_footer_branch
        %564 = sbr.rel target = $region37
      $region42: #{tpu_custom_call.1} parent=27 // loop_exit
        _
    $region28: #{tpu_custom_call.1} parent=12 // pred_fallthru
      _
  $region13: #{tpu_custom_call.1} parent=0 // pred_fallthru
    _
  // Predicated region
  $region14: #{tpu_custom_call.1} parent=0 // pred_check
    %p21 = pneg %p17
  $region15: #{tpu_custom_call.1} parent=0 // pred_check_branch
    %23 = sbr.rel (%p21) target = $region17
  $region16: #{tpu_custom_call.1} parent=0 // pred_region
    %s24 = sshllo.u32 0, 60
    loop: start=0, step=1, limit=1
    $region18: #{tpu_custom_call.1} parent=16 // loop_pre_header
      _
    $region19: #{tpu_custom_call.1} parent=16 // loop_header
      %s26 = sphi 0, %s30
      %p27 = scmp.ge.s32.totalorder %s26, 1
      %s31 = sphi %s14, %s14
      %s32 = sphi %s15, %s15
    $region20: #{tpu_custom_call.1} parent=16 // loop_header_branch
      %29 = sbr.rel (%p27) target = $region24
    $region21: #{tpu_custom_call.1} parent=16 // loop_body
      %v33 = vld [vmem:[%s31] sm:%s24]
      %34 = vst [vmem:[%s32] sm:%s24] %v33
      %v35 = vld [vmem:[%s31 + $0x40] sm:%s24]
      %36 = vst [vmem:[%s32 + $0x50] sm:%s24] %v35
      %v37 = vld [vmem:[%s31 + $0x80] sm:%s24]
      %38 = vst [vmem:[%s32 + $0xa0] sm:%s24] %v37
      %v39 = vld [vmem:[%s31 + $0xc0] sm:%s24]
      %40 = vst [vmem:[%s32 + $0xf0] sm:%s24] %v39
      %v41 = vld [vmem:[%s31 + $0x100] sm:%s24]
      %42 = vst [vmem:[%s32 + $0x140] sm:%s24] %v41
      %v43 = vld [vmem:[%s31 + $0x140] sm:%s24]
      %44 = vst [vmem:[%s32 + $0x190] sm:%s24] %v43
      %v45 = vld [vmem:[%s31 + $0x180] sm:%s24]
      %46 = vst [vmem:[%s32 + $0x1e0] sm:%s24] %v45
      %v47 = vld [vmem:[%s31 + $0x1c0] sm:%s24]
      %48 = vst [vmem:[%s32 + $0x230] sm:%s24] %v47
      %v49 = vld [vmem:[%s31 + $0x200] sm:%s24]
      %50 = vst [vmem:[%s32 + $0x280] sm:%s24] %v49
      %v51 = vld [vmem:[%s31 + $0x240] sm:%s24]
      %52 = vst [vmem:[%s32 + $0x2d0] sm:%s24] %v51
      %v53 = vld [vmem:[%s31 + $0x280] sm:%s24]
      %54 = vst [vmem:[%s32 + $0x320] sm:%s24] %v53
      %v55 = vld [vmem:[%s31 + $0x2c0] sm:%s24]
      %56 = vst [vmem:[%s32 + $0x370] sm:%s24] %v55
      %v57 = vld [vmem:[%s31 + $0x300] sm:%s24]
      %58 = vst [vmem:[%s32 + $0x3c0] sm:%s24] %v57
      %v59 = vld [vmem:[%s31 + $0x340] sm:%s24]
      %60 = vst [vmem:[%s32 + $0x410] sm:%s24] %v59
      %v61 = vld [vmem:[%s31 + $0x380] sm:%s24]
      %62 = vst [vmem:[%s32 + $0x460] sm:%s24] %v61
      %v63 = vld [vmem:[%s31 + $0x3c0] sm:%s24]
      %64 = vst [vmem:[%s32 + $0x4b0] sm:%s24] %v63
      %v65 = vld [vmem:[%s31 + $0x400] sm:%s24]
      %66 = vst [vmem:[%s32 + $0x500] sm:%s24] %v65
      %v67 = vld [vmem:[%s31 + $0x440] sm:%s24]
      %68 = vst [vmem:[%s32 + $0x550] sm:%s24] %v67
      %v69 = vld [vmem:[%s31 + $0x480] sm:%s24]
      %70 = vst [vmem:[%s32 + $0x5a0] sm:%s24] %v69
      %v71 = vld [vmem:[%s31 + $0x4c0] sm:%s24]
      %72 = vst [vmem:[%s32 + $0x5f0] sm:%s24] %v71
      %v73 = vld [vmem:[%s31 + $0x500] sm:%s24]
      %74 = vst [vmem:[%s32 + $0x640] sm:%s24] %v73
      %v75 = vld [vmem:[%s31 + $0x540] sm:%s24]
      %76 = vst [vmem:[%s32 + $0x690] sm:%s24] %v75
      %v77 = vld [vmem:[%s31 + $0x580] sm:%s24]
      %78 = vst [vmem:[%s32 + $0x6e0] sm:%s24] %v77
      %v79 = vld [vmem:[%s31 + $0x5c0] sm:%s24]
      %80 = vst [vmem:[%s32 + $0x730] sm:%s24] %v79
      %v81 = vld [vmem:[%s31 + $0x600] sm:%s24]
      %82 = vst [vmem:[%s32 + $0x780] sm:%s24] %v81
      %v83 = vld [vmem:[%s31 + $0x640] sm:%s24]
      %84 = vst [vmem:[%s32 + $0x7d0] sm:%s24] %v83
      %v85 = vld [vmem:[%s31 + $0x680] sm:%s24]
      %86 = vst [vmem:[%s32 + $0x820] sm:%s24] %v85
      %v87 = vld [vmem:[%s31 + $0x6c0] sm:%s24]
      %88 = vst [vmem:[%s32 + $0x870] sm:%s24] %v87
      %v89 = vld [vmem:[%s31 + $0x700] sm:%s24]
      %90 = vst [vmem:[%s32 + $0x8c0] sm:%s24] %v89
      %v91 = vld [vmem:[%s31 + $0x740] sm:%s24]
      %92 = vst [vmem:[%s32 + $0x910] sm:%s24] %v91
      %v93 = vld [vmem:[%s31 + $0x780] sm:%s24]
      %94 = vst [vmem:[%s32 + $0x960] sm:%s24] %v93
      %v95 = vld [vmem:[%s31 + $0x7c0] sm:%s24]
      %96 = vst [vmem:[%s32 + $0x9b0] sm:%s24] %v95
    $region22: #{tpu_custom_call.1} parent=16 // loop_footer
      %s30 = sadd.s32 1, %s26
    $region23: #{tpu_custom_call.1} parent=16 // loop_footer_branch
      %25 = sbr.rel target = $region19
    $region24: #{tpu_custom_call.1} parent=16 // loop_exit
      _
  $region17: #{tpu_custom_call.1} parent=0 // pred_fallthru
    _
  // Predicated region
  $region43: #{tpu_custom_call.1} parent=0 // pred_check
    _
  $region44: #{tpu_custom_call.1} parent=0 // pred_check_branch
    %638 = sbr.rel (0) target = $region46
  $region45: #{tpu_custom_call.1} parent=0 // pred_region
    %639 = vsyncadd [#allocation2], 30720
  $region46: #{tpu_custom_call.1} parent=0 // pred_fallthru
    _
  %v640 = vld [vmem:[%s1] sm:$0xff]
  %v641 = vld [vmem:[%s1 + $0x8] sm:$0xff]
  loop: start=0, step=1, limit=32
  $region47: #{tpu_custom_call.1} parent=0 // loop_pre_header
    _
  $region48: #{tpu_custom_call.1} parent=0 // loop_header
    %s643 = sphi 0, %s647
    %p644 = scmp.ge.s32.totalorder %s643, 32
  $region49: #{tpu_custom_call.1} parent=0 // loop_header_branch
    %646 = sbr.rel (%p644) target = $region53
  $region50: #{tpu_custom_call.1} parent=0 // loop_body
    %s648 = scalar_lea.vmem %s0, %s643
    %v649 = vld [vmem:[%s648] sm:$0x1]
    %s650 = smul.u32 %s643, 80
    %s651 = scalar_lea.vmem %s3, %s650
    %652 = vst [vmem:[%s651] sm:$0x1] %v649
    %653 = vst [vmem:[%s651 + $0x1] sm:$0xff] %v640
    %654 = vst [vmem:[%s651 + $0x9] sm:$0xff] %v641
  $region51: #{tpu_custom_call.1} parent=0 // loop_footer
    %s647 = sadd.s32 1, %s643
  $region52: #{tpu_custom_call.1} parent=0 // loop_footer_branch
    %642 = sbr.rel target = $region48
  $region53: #{tpu_custom_call.1} parent=0 // loop_exit
    _
  %s655 = smul.u32 32, 60
  %s656 = smul.u32 %s655, 1
  %s657 = sshll.u32 %s656, 4
  %658 = dma.done [#allocation2], %s657
  // Predicated region
  $region54: #{tpu_custom_call.1} parent=0 // pred_check
    _
  $region55: #{tpu_custom_call.1} parent=0 // pred_check_branch
    %660 = sbr.rel (0) target = $region57
  $region56: #{tpu_custom_call.1} parent=0 // pred_region
    _
  $region57: #{tpu_custom_call.1} parent=0 // pred_fallthru
    _
  // Predicated region
  $region58: #{tpu_custom_call.1} parent=0 // pred_check
    _
  $region59: #{tpu_custom_call.1} parent=0 // pred_check_branch
    %662 = sbr.rel (0) target = $region61
  $region60: #{tpu_custom_call.1} parent=0 // pred_region
    _
  $region61: #{tpu_custom_call.1} parent=0 // pred_fallthru
    _
  %663 = vsyncmov [#allocation2]
  %s664 = vpop.sfrf %663
  %p665 = scmp.eq.s32.totalorder %s664, 0
  %p666 = pneg %p665
  %668 = shalt.err (%p666)

</llo_original>
